<compile_context>
chip_gen: v5e
topology: v5e:2x2
jax: 0.10.0
libtpu: 0.0.40
codegen_flags: <defaults>
</compile_context>

<pallas_src>
import jax
import jax.numpy as jnp
from jax.experimental import pallas as pl
from jax.experimental.pallas import tpu as pltpu


def _round_up(n, m):
    return ((n + m - 1) // m) * m


def _vmem_capacity_bytes():
    # Generation-aware budget: 128 MiB on v5e/v6e, 64 MiB per TensorCore on
    # v7x.  Fall back to the v7x (smallest) value if the query is unavailable.
    try:
        return int(pltpu.get_tpu_info().vmem_capacity_bytes)
    except Exception:
        return 64 * 1024 * 1024


def _choose_tile_rows(n_rows, label_size, vmem_capacity):
    # VMEM cost per row is the *lane-padded* width: a (rows, L) f32 block with
    # L < 128 is padded to 128 lanes in VMEM (4x the HBM bytes for L=32).
    padded_cols = _round_up(max(label_size, 128), 128)
    row_vmem_bytes = 4 * padded_cols
    # Double-buffered input gets ~half of VMEM; the rest covers the output
    # buffers, compiler scratch and headroom.
    per_buffer_budget = (vmem_capacity // 2) // 2
    tile = per_buffer_budget // row_vmem_bytes
    if tile >= 1024:
        tile = (tile // 1024) * 1024
    else:
        tile = max(128, (tile // 128) * 128)
    # Never larger than the (128-row-padded) problem itself.
    tile = min(tile, _round_up(n_rows, 128))
    return max(tile, 128)


def _argmax_rows_kernel(x_ref, tag_ref):
    # x_ref block:   (TILE_ROWS, L) float logits
    # tag_ref block: (1, TILE_ROWS // 128, 128) int32 (lane/sublane dense)
    x = x_ref[...]
    L = x.shape[-1]

    # argmax over the label (lane) dim, first index on ties: two XLU reduces.
    row_max = jnp.max(x, axis=-1, keepdims=True)
    lane_idx = jax.lax.broadcasted_iota(jnp.int32, x.shape, dimension=1)
    masked_idx = jnp.where(x == row_max, lane_idx, jnp.int32(L))
    tag = jnp.min(masked_idx, axis=-1)                    # (TILE_ROWS,)
    # NaN-row guard: an all-NaN row has no lane equal to its max -> tag == L;
    # clamp into the valid range (no effect on ordinary rows).
    tag = jnp.minimum(tag, jnp.int32(L - 1))

    tag_ref[...] = tag.reshape(tag_ref.shape).astype(jnp.int32)


def softmax_tagger_forward(x, tile_rows=None):
    """x: [B, S, L] float logits -> [B, S] int32 tags (computed in Pallas)."""
    B, S, L = x.shape
    R = B * S
    vmem_capacity = _vmem_capacity_bytes()
    if tile_rows is None:
        tile_rows = _choose_tile_rows(R, L, vmem_capacity)
    assert tile_rows % 128 == 0
    num_tiles = -(-R // tile_rows)          # ceil-div (no padding pass)
    rows128 = tile_rows // 128

    x2 = x.reshape(R, L)                    # contiguous reshape: free

    # Raise the scoped-VMEM limit so the large double-buffered blocks compile,
    # while staying inside physical VMEM (64 MiB/TC on v7x, 128 MiB v5e/v6e).
    in_block_bytes = tile_rows * _round_up(max(L, 128), 128) * 4
    out_block_bytes = rows128 * 128 * 4
    vmem_limit = 2 * (in_block_bytes + out_block_bytes) + (8 << 20)
    vmem_limit = min(max(vmem_limit, 32 << 20), int(vmem_capacity * 0.9))

    cost = pl.CostEstimate(
        flops=2 * R * L,
        transcendentals=0,
        bytes_accessed=R * L * x2.dtype.itemsize + R * 4,
    )

    tags = pl.pallas_call(
        _argmax_rows_kernel,
        out_shape=jax.ShapeDtypeStruct((num_tiles, rows128, 128), jnp.int32),
        grid=(num_tiles,),
        in_specs=[pl.BlockSpec((tile_rows, L), lambda i: (i, 0))],
        out_specs=pl.BlockSpec((1, rows128, 128), lambda i: (i, 0, 0)),
        compiler_params=pltpu.CompilerParams(
            dimension_semantics=("parallel",),
            vmem_limit_bytes=int(vmem_limit),
        ),
        cost_estimate=cost,
    )(x2)

    # Tail-block garbage tags (out-of-range reads) are dropped by [:R].
    return tags.reshape(num_tiles * tile_rows)[:R].reshape(B, S)


def softmax_tagger_forward_as_list(x):
    # Matches the PyTorch return type List[List[int]] (host glue, not kernel).
    return softmax_tagger_forward(x).tolist()


if __name__ == "__main__":
    # SoftmaxTagger has no learned parameters; config.label_size == L below.
    B, S, L = 2, 8, 32  # batch, seq, label_size
    x = jax.random.normal(jax.random.PRNGKey(0), (B, S, L), dtype=jnp.float32)

    tags = softmax_tagger_forward(x)
    jax.block_until_ready(tags)

    # Reference: argmax of softmax == argmax of logits (softmax is monotone).
    ref = jnp.argmax(jax.nn.softmax(x, axis=-1), axis=-1).astype(jnp.int32)
    assert jnp.array_equal(tags, ref), (tags, ref)

    # Exercise the multi-tile + partial-tail path with a small forced tile:
    # R = 1000 rows, tile 256 -> grid of 4 with a ragged last block.
    B2, S2 = 4, 250
    x_mt = jax.random.normal(jax.random.PRNGKey(1), (B2, S2, L), dtype=jnp.float32)
    tags_mt = softmax_tagger_forward(x_mt, tile_rows=256)
    jax.block_until_ready(tags_mt)
    ref_mt = jnp.argmax(jax.nn.softmax(x_mt, axis=-1), axis=-1).astype(jnp.int32)
    assert jnp.array_equal(tags_mt, ref_mt)

    # Exercise the list-of-lists wrapper as well (PyTorch return type).
    _ = softmax_tagger_forward_as_list(x)

    print("KERNEL_OK")
</pallas_src>

<mosaic_0001>
module attributes {stable_mosaic.version = 11 : i64} {
  func.func @_argmax_rows_kernel(%arg0: i32, %arg1: memref<128x32xf32, #tpu.memory_space<vmem>>, %arg2: memref<1x1x128xi32, #tpu.memory_space<vmem>>) attributes {dimension_semantics = [#tpu.dimension_semantics<parallel>], iteration_bounds = array<i64: 1>, scalar_prefetch = 0 : i64, scratch_operands = 0 : i64, tpu.core_type = #tpu.core_type<tc>, window_params = [{transform_indices = @transform_0, window_bounds = array<i64: 128, 32>}, {transform_indices = @transform_1, window_bounds = array<i64: 1, 1, 128>}]} {
    %c0 = arith.constant 0 : index
    %c0_0 = arith.constant 0 : index
    %0 = vector.load %arg1[%c0, %c0_0] : memref<128x32xf32, #tpu.memory_space<vmem>>, vector<128x32xf32>
    %cst = arith.constant dense<0xFF800000> : vector<128xf32>
    %1 = vector.multi_reduction <maximumf>, %0, %cst [1] : vector<128x32xf32> to vector<128xf32>
    %2 = vector.shape_cast %1 : vector<128xf32> to vector<128x1xf32>
    %3 = tpu.iota {dimensions = array<i32: 1>} : vector<128x32xi32>
    %4 = vector.broadcast %2 : vector<128x1xf32> to vector<128x32xf32>
    %5 = arith.cmpf oeq, %0, %4 : vector<128x32xf32>
    %c32_i32 = arith.constant 32 : i32
    %6 = vector.broadcast %c32_i32 : i32 to vector<128x32xi32>
    %7 = arith.select %5, %3, %6 : vector<128x32xi1>, vector<128x32xi32>
    %cst_1 = arith.constant dense<2147483647> : vector<128xi32>
    %8 = vector.multi_reduction <minsi>, %7, %cst_1 [1] : vector<128x32xi32> to vector<128xi32>
    %c31_i32 = arith.constant 31 : i32
    %9 = vector.broadcast %c31_i32 : i32 to vector<128xi32>
    %10 = arith.minsi %8, %9 : vector<128xi32>
    %11 = vector.shape_cast %10 : vector<128xi32> to vector<1x1x128xi32>
    %c0_2 = arith.constant 0 : index
    %c0_3 = arith.constant 0 : index
    %c0_4 = arith.constant 0 : index
    %12 = vector.load %arg2[%c0_2, %c0_3, %c0_4] : memref<1x1x128xi32, #tpu.memory_space<vmem>>, vector<1x1x128xi32>
    tpu.vector_store %arg2[%c0_2, %c0_3, %c0_4], %11 {strides = array<i32>} : memref<1x1x128xi32, #tpu.memory_space<vmem>>, vector<1x1x128xi32>,
    return
  }
  func.func @transform_0(%arg0: i32) -> (i32, i32) {
    %c0_i32 = arith.constant 0 : i32
    %c0_i32_0 = arith.constant 0 : i32
    return %arg0, %c0_i32 : i32, i32
  }
  func.func @transform_1(%arg0: i32) -> (i32, i32, i32) {
    %c0_i32 = arith.constant 0 : i32
    %c0_i32_0 = arith.constant 0 : i32
    %c0_i32_1 = arith.constant 0 : i32
    return %arg0, %c0_i32, %c0_i32_0 : i32, i32, i32
  }
}

</mosaic_0001>

<llo_original>
// kernel: tpu_custom_call.1
$region0: #{tpu_custom_call.1}
  #allocation0 [shape = 'u32[]', space=smem, size = 0x4, offset = 0x4, fixed_abs, tag = 'smem constant byte address 0x4 - core index']
  #allocation1 [shape = 'u32[72,128]{1,0:T(1,128)}', space=vmem, size = 0x9000, scoped, tag = 'internal scratch']
  %s0 = inlined_call_operand.hbm [shape: f32[16,32], index: 0, kind: input, shape index: {}]
  %s1 = inlined_call_operand.hbm [shape: s32[1,1,128], index: 1, kind: output, shape index: {}]
  %s2 = sld [smem:[#allocation0]]
  $region18: #{tpu_custom_call.1} parent=0
    _
  %s4 = ssub.s32 1, %s2
  %s5 = scalar_select 0, %s4, %s2
  $region1: #{tpu_custom_call.1} parent=0
    #allocation2 [shape = 'u8[65536]{0}', space=vmem, size = 0x10000, scoped, tag = 'input window, operand 0, single buffered']
    #allocation3 [shape = 's32[1]{0}', space=sflag, size = 0x4, scoped, tag = 'scoped memory for tpu_custom_call.1']
    #allocation4 [shape = 's32[1]{0}', space=sflag, size = 0x4, scoped, tag = 'scoped memory for tpu_custom_call.1']
    #allocation5 [shape = 'u8[512]{0}', space=vmem, size = 0x400, scoped, tag = 'output window, operand 0, single buffered']
    %6 = vsyncpa [#allocation3], 0
    %7 = vsyncpa [#allocation4], 0
    // Predicated region
    $region2: #{tpu_custom_call.1} parent=1 // pred_check
      _
    $region3: #{tpu_custom_call.1} parent=1 // pred_check_branch
      %9 = sbr.rel (0) target = $region5
    $region4: #{tpu_custom_call.1} parent=1 // pred_region
      %11 = vsyncadd [#allocation3], 1792
      %s12 = sshll.u32 %s0, 4
      %s13 = int_to_ptr.hbm [resolvable:$true] %s12
      %s14 = sshll.u32 [#allocation2], 4
      %s15 = int_to_ptr.vmem [resolvable:$true] %s14
      %20 = dma.hbm_to_vmem [thread:$0]  %s13, 256, %s15, [#allocation3], 128, 128, 8
    $region5: #{tpu_custom_call.1} parent=1 // pred_fallthru
      _
    // Predicated region
    $region6: #{tpu_custom_call.1} parent=1 // pred_check
      _
    $region7: #{tpu_custom_call.1} parent=1 // pred_check_branch
      %22 = sbr.rel (0) target = $region9
    $region8: #{tpu_custom_call.1} parent=1 // pred_region
      %24 = dma.done [#allocation3], 2048
    $region9: #{tpu_custom_call.1} parent=1 // pred_fallthru
      _
    %v25 = vld [vmem:[#allocation2] sm:$0xff]
    %v26 = vld [vmem:[#allocation2 + $0x8] sm:$0xff]
    %v27 = vld [vmem:[#allocation2 + $0x10] sm:$0xff]
    %v28 = vld [vmem:[#allocation2 + $0x18] sm:$0xff]
    %v29 = vld [vmem:[#allocation2 + $0x20] sm:$0xff]
    %v30 = vld [vmem:[#allocation2 + $0x28] sm:$0xff]
    %v31 = vld [vmem:[#allocation2 + $0x30] sm:$0xff]
    %v32 = vld [vmem:[#allocation2 + $0x38] sm:$0xff]
    %v33 = vld [vmem:[#allocation2 + $0x40] sm:$0xff]
    %v34 = vld [vmem:[#allocation2 + $0x48] sm:$0xff]
    %v35 = vld [vmem:[#allocation2 + $0x50] sm:$0xff]
    %v36 = vld [vmem:[#allocation2 + $0x58] sm:$0xff]
    %v37 = vld [vmem:[#allocation2 + $0x60] sm:$0xff]
    %v38 = vld [vmem:[#allocation2 + $0x68] sm:$0xff]
    %v39 = vld [vmem:[#allocation2 + $0x70] sm:$0xff]
    %v40 = vld [vmem:[#allocation2 + $0x78] sm:$0xff]
    %vm41 = vcmask 261120
    %v42 = vsel %vm41, %v25, -inf
    %43 = vmax.xlane.f32.xlu0 %v42
    %v44 = vpop.xlane.xlu0 %43
    %v45 = vsel %vm41, %v26, -inf
    %46 = vmax.xlane.f32.xlu0 %v45
    %v47 = vpop.xlane.xlu0 %46
    %v48 = vsel %vm41, %v27, -inf
    %49 = vmax.xlane.f32.xlu0 %v48
    %v50 = vpop.xlane.xlu0 %49
    %v51 = vsel %vm41, %v28, -inf
    %52 = vmax.xlane.f32.xlu0 %v51
    %v53 = vpop.xlane.xlu0 %52
    %v54 = vsel %vm41, %v29, -inf
    %55 = vmax.xlane.f32.xlu0 %v54
    %v56 = vpop.xlane.xlu0 %55
    %v57 = vsel %vm41, %v30, -inf
    %58 = vmax.xlane.f32.xlu0 %v57
    %v59 = vpop.xlane.xlu0 %58
    %v60 = vsel %vm41, %v31, -inf
    %61 = vmax.xlane.f32.xlu0 %v60
    %v62 = vpop.xlane.xlu0 %61
    %v63 = vsel %vm41, %v32, -inf
    %64 = vmax.xlane.f32.xlu0 %v63
    %v65 = vpop.xlane.xlu0 %64
    %v66 = vsel %vm41, %v33, -inf
    %67 = vmax.xlane.f32.xlu0 %v66
    %v68 = vpop.xlane.xlu0 %67
    %v69 = vsel %vm41, %v34, -inf
    %70 = vmax.xlane.f32.xlu0 %v69
    %v71 = vpop.xlane.xlu0 %70
    %v72 = vsel %vm41, %v35, -inf
    %73 = vmax.xlane.f32.xlu0 %v72
    %v74 = vpop.xlane.xlu0 %73
    %v75 = vsel %vm41, %v36, -inf
    %76 = vmax.xlane.f32.xlu0 %v75
    %v77 = vpop.xlane.xlu0 %76
    %v78 = vsel %vm41, %v37, -inf
    %79 = vmax.xlane.f32.xlu0 %v78
    %v80 = vpop.xlane.xlu0 %79
    %v81 = vsel %vm41, %v38, -inf
    %82 = vmax.xlane.f32.xlu0 %v81
    %v83 = vpop.xlane.xlu0 %82
    %v84 = vsel %vm41, %v39, -inf
    %85 = vmax.xlane.f32.xlu0 %v84
    %v86 = vpop.xlane.xlu0 %85
    %v87 = vsel %vm41, %v40, -inf
    %88 = vmax.xlane.f32.xlu0 %v87
    %v89 = vpop.xlane.xlu0 %88
    %v90 = vlaneseq
    %v91 = vand.u32 %v90, 127
    %vm92 = vcmp.eq.f32.partialorder %v25, %v44
    %vm93 = vcmp.eq.f32.partialorder %v26, %v47
    %vm94 = vcmp.eq.f32.partialorder %v27, %v50
    %vm95 = vcmp.eq.f32.partialorder %v28, %v53
    %vm96 = vcmp.eq.f32.partialorder %v29, %v56
    %vm97 = vcmp.eq.f32.partialorder %v30, %v59
    %vm98 = vcmp.eq.f32.partialorder %v31, %v62
    %vm99 = vcmp.eq.f32.partialorder %v32, %v65
    %vm100 = vcmp.eq.f32.partialorder %v33, %v68
    %vm101 = vcmp.eq.f32.partialorder %v34, %v71
    %vm102 = vcmp.eq.f32.partialorder %v35, %v74
    %vm103 = vcmp.eq.f32.partialorder %v36, %v77
    %vm104 = vcmp.eq.f32.partialorder %v37, %v80
    %vm105 = vcmp.eq.f32.partialorder %v38, %v83
    %vm106 = vcmp.eq.f32.partialorder %v39, %v86
    %vm107 = vcmp.eq.f32.partialorder %v40, %v89
    %v108 = vsel %vm92, %v91, 32
    %v109 = vsel %vm93, %v91, 32
    %v110 = vsel %vm94, %v91, 32
    %v111 = vsel %vm95, %v91, 32
    %v112 = vsel %vm96, %v91, 32
    %v113 = vsel %vm97, %v91, 32
    %v114 = vsel %vm98, %v91, 32
    %v115 = vsel %vm99, %v91, 32
    %v116 = vsel %vm100, %v91, 32
    %v117 = vsel %vm101, %v91, 32
    %v118 = vsel %vm102, %v91, 32
    %v119 = vsel %vm103, %v91, 32
    %v120 = vsel %vm104, %v91, 32
    %v121 = vsel %vm105, %v91, 32
    %v122 = vsel %vm106, %v91, 32
    %v123 = vsel %vm107, %v91, 32
    %v124 = vsel %vm41, %v108, 2147483647
    %v125 = vand.u32 %v124, 65535
    %v126 = vshra.s32 %v124, 16
    %v127 = vcvt.s32.f32 %v125
    %v128 = vcvt.s32.f32 %v126
    %129 = vmin.xlane.f32.xlu0 %v128
    %v130 = vpop.xlane.xlu0 %129
    %vm131 = vcmp.eq.f32.partialorder %v128, %v130
    %v132 = vsel %vm131, %v127, inf
    %133 = vmin.xlane.f32.xlu0 %v132
    %v134 = vpop.xlane.xlu0 %133
    %v135 = vcvt.f32.s32 %v134
    %v136 = vcvt.f32.s32 %v130
    %v137 = vshll.u32 %v136, 16
    %v138 = vadd.s32 %v137, %v135
    %v139 = vsel %vm41, %v109, 2147483647
    %v140 = vand.u32 %v139, 65535
    %v141 = vshra.s32 %v139, 16
    %v142 = vcvt.s32.f32 %v140
    %v143 = vcvt.s32.f32 %v141
    %144 = vmin.xlane.f32.xlu0 %v143
    %v145 = vpop.xlane.xlu0 %144
    %vm146 = vcmp.eq.f32.partialorder %v143, %v145
    %v147 = vsel %vm146, %v142, inf
    %148 = vmin.xlane.f32.xlu0 %v147
    %v149 = vpop.xlane.xlu0 %148
    %v150 = vcvt.f32.s32 %v149
    %v151 = vcvt.f32.s32 %v145
    %v152 = vshll.u32 %v151, 16
    %v153 = vadd.s32 %v152, %v150
    %v154 = vsel %vm41, %v110, 2147483647
    %v155 = vand.u32 %v154, 65535
    %v156 = vshra.s32 %v154, 16
    %v157 = vcvt.s32.f32 %v155
    %v158 = vcvt.s32.f32 %v156
    %159 = vmin.xlane.f32.xlu0 %v158
    %v160 = vpop.xlane.xlu0 %159
    %vm161 = vcmp.eq.f32.partialorder %v158, %v160
    %v162 = vsel %vm161, %v157, inf
    %163 = vmin.xlane.f32.xlu0 %v162
    %v164 = vpop.xlane.xlu0 %163
    %v165 = vcvt.f32.s32 %v164
    %v166 = vcvt.f32.s32 %v160
    %v167 = vshll.u32 %v166, 16
    %v168 = vadd.s32 %v167, %v165
    %v169 = vsel %vm41, %v111, 2147483647
    %v170 = vand.u32 %v169, 65535
    %v171 = vshra.s32 %v169, 16
    %v172 = vcvt.s32.f32 %v170
    %v173 = vcvt.s32.f32 %v171
    %174 = vmin.xlane.f32.xlu0 %v173
    %v175 = vpop.xlane.xlu0 %174
    %vm176 = vcmp.eq.f32.partialorder %v173, %v175
    %v177 = vsel %vm176, %v172, inf
    %178 = vmin.xlane.f32.xlu0 %v177
    %v179 = vpop.xlane.xlu0 %178
    %v180 = vcvt.f32.s32 %v179
    %v181 = vcvt.f32.s32 %v175
    %v182 = vshll.u32 %v181, 16
    %v183 = vadd.s32 %v182, %v180
    %v184 = vsel %vm41, %v112, 2147483647
    %v185 = vand.u32 %v184, 65535
    %v186 = vshra.s32 %v184, 16
    %v187 = vcvt.s32.f32 %v185
    %v188 = vcvt.s32.f32 %v186
    %189 = vmin.xlane.f32.xlu0 %v188
    %v190 = vpop.xlane.xlu0 %189
    %vm191 = vcmp.eq.f32.partialorder %v188, %v190
    %v192 = vsel %vm191, %v187, inf
    %193 = vmin.xlane.f32.xlu0 %v192
    %v194 = vpop.xlane.xlu0 %193
    %v195 = vcvt.f32.s32 %v194
    %v196 = vcvt.f32.s32 %v190
    %v197 = vshll.u32 %v196, 16
    %v198 = vadd.s32 %v197, %v195
    %v199 = vsel %vm41, %v113, 2147483647
    %v200 = vand.u32 %v199, 65535
    %v201 = vshra.s32 %v199, 16
    %v202 = vcvt.s32.f32 %v200
    %v203 = vcvt.s32.f32 %v201
    %204 = vmin.xlane.f32.xlu0 %v203
    %v205 = vpop.xlane.xlu0 %204
    %vm206 = vcmp.eq.f32.partialorder %v203, %v205
    %v207 = vsel %vm206, %v202, inf
    %208 = vmin.xlane.f32.xlu0 %v207
    %v209 = vpop.xlane.xlu0 %208
    %v210 = vcvt.f32.s32 %v209
    %v211 = vcvt.f32.s32 %v205
    %v212 = vshll.u32 %v211, 16
    %v213 = vadd.s32 %v212, %v210
    %v214 = vsel %vm41, %v114, 2147483647
    %v215 = vand.u32 %v214, 65535
    %v216 = vshra.s32 %v214, 16
    %v217 = vcvt.s32.f32 %v215
    %v218 = vcvt.s32.f32 %v216
    %219 = vmin.xlane.f32.xlu0 %v218
    %v220 = vpop.xlane.xlu0 %219
    %vm221 = vcmp.eq.f32.partialorder %v218, %v220
    %v222 = vsel %vm221, %v217, inf
    %223 = vmin.xlane.f32.xlu0 %v222
    %v224 = vpop.xlane.xlu0 %223
    %v225 = vcvt.f32.s32 %v224
    %v226 = vcvt.f32.s32 %v220
    %v227 = vshll.u32 %v226, 16
    %v228 = vadd.s32 %v227, %v225
    %v229 = vsel %vm41, %v115, 2147483647
    %v230 = vand.u32 %v229, 65535
    %v231 = vshra.s32 %v229, 16
    %v232 = vcvt.s32.f32 %v230
    %v233 = vcvt.s32.f32 %v231
    %234 = vmin.xlane.f32.xlu0 %v233
    %v235 = vpop.xlane.xlu0 %234
    %vm236 = vcmp.eq.f32.partialorder %v233, %v235
    %v237 = vsel %vm236, %v232, inf
    %238 = vmin.xlane.f32.xlu0 %v237
    %v239 = vpop.xlane.xlu0 %238
    %v240 = vcvt.f32.s32 %v239
    %v241 = vcvt.f32.s32 %v235
    %v242 = vshll.u32 %v241, 16
    %v243 = vadd.s32 %v242, %v240
    %v244 = vsel %vm41, %v116, 2147483647
    %v245 = vand.u32 %v244, 65535
    %v246 = vshra.s32 %v244, 16
    %v247 = vcvt.s32.f32 %v245
    %v248 = vcvt.s32.f32 %v246
    %249 = vmin.xlane.f32.xlu0 %v248
    %v250 = vpop.xlane.xlu0 %249
    %vm251 = vcmp.eq.f32.partialorder %v248, %v250
    %v252 = vsel %vm251, %v247, inf
    %253 = vmin.xlane.f32.xlu0 %v252
    %v254 = vpop.xlane.xlu0 %253
    %v255 = vcvt.f32.s32 %v254
    %v256 = vcvt.f32.s32 %v250
    %v257 = vshll.u32 %v256, 16
    %v258 = vadd.s32 %v257, %v255
    %v259 = vsel %vm41, %v117, 2147483647
    %v260 = vand.u32 %v259, 65535
    %v261 = vshra.s32 %v259, 16
    %v262 = vcvt.s32.f32 %v260
    %v263 = vcvt.s32.f32 %v261
    %264 = vmin.xlane.f32.xlu0 %v263
    %v265 = vpop.xlane.xlu0 %264
    %vm266 = vcmp.eq.f32.partialorder %v263, %v265
    %v267 = vsel %vm266, %v262, inf
    %268 = vmin.xlane.f32.xlu0 %v267
    %v269 = vpop.xlane.xlu0 %268
    %v270 = vcvt.f32.s32 %v269
    %v271 = vcvt.f32.s32 %v265
    %v272 = vshll.u32 %v271, 16
    %v273 = vadd.s32 %v272, %v270
    %v274 = vsel %vm41, %v118, 2147483647
    %v275 = vand.u32 %v274, 65535
    %v276 = vshra.s32 %v274, 16
    %v277 = vcvt.s32.f32 %v275
    %v278 = vcvt.s32.f32 %v276
    %279 = vmin.xlane.f32.xlu0 %v278
    %v280 = vpop.xlane.xlu0 %279
    %vm281 = vcmp.eq.f32.partialorder %v278, %v280
    %v282 = vsel %vm281, %v277, inf
    %283 = vmin.xlane.f32.xlu0 %v282
    %v284 = vpop.xlane.xlu0 %283
    %v285 = vcvt.f32.s32 %v284
    %v286 = vcvt.f32.s32 %v280
    %v287 = vshll.u32 %v286, 16
    %v288 = vadd.s32 %v287, %v285
    %v289 = vsel %vm41, %v119, 2147483647
    %v290 = vand.u32 %v289, 65535
    %v291 = vshra.s32 %v289, 16
    %v292 = vcvt.s32.f32 %v290
    %v293 = vcvt.s32.f32 %v291
    %294 = vmin.xlane.f32.xlu0 %v293
    %v295 = vpop.xlane.xlu0 %294
    %vm296 = vcmp.eq.f32.partialorder %v293, %v295
    %v297 = vsel %vm296, %v292, inf
    %298 = vmin.xlane.f32.xlu0 %v297
    %v299 = vpop.xlane.xlu0 %298
    %v300 = vcvt.f32.s32 %v299
    %v301 = vcvt.f32.s32 %v295
    %v302 = vshll.u32 %v301, 16
    %v303 = vadd.s32 %v302, %v300
    %v304 = vsel %vm41, %v120, 2147483647
    %v305 = vand.u32 %v304, 65535
    %v306 = vshra.s32 %v304, 16
    %v307 = vcvt.s32.f32 %v305
    %v308 = vcvt.s32.f32 %v306
    %309 = vmin.xlane.f32.xlu0 %v308
    %v310 = vpop.xlane.xlu0 %309
    %vm311 = vcmp.eq.f32.partialorder %v308, %v310
    %v312 = vsel %vm311, %v307, inf
    %313 = vmin.xlane.f32.xlu0 %v312
    %v314 = vpop.xlane.xlu0 %313
    %v315 = vcvt.f32.s32 %v314
    %v316 = vcvt.f32.s32 %v310
    %v317 = vshll.u32 %v316, 16
    %v318 = vadd.s32 %v317, %v315
    %v319 = vsel %vm41, %v121, 2147483647
    %v320 = vand.u32 %v319, 65535
    %v321 = vshra.s32 %v319, 16
    %v322 = vcvt.s32.f32 %v320
    %v323 = vcvt.s32.f32 %v321
    %324 = vmin.xlane.f32.xlu0 %v323
    %v325 = vpop.xlane.xlu0 %324
    %vm326 = vcmp.eq.f32.partialorder %v323, %v325
    %v327 = vsel %vm326, %v322, inf
    %328 = vmin.xlane.f32.xlu0 %v327
    %v329 = vpop.xlane.xlu0 %328
    %v330 = vcvt.f32.s32 %v329
    %v331 = vcvt.f32.s32 %v325
    %v332 = vshll.u32 %v331, 16
    %v333 = vadd.s32 %v332, %v330
    %v334 = vsel %vm41, %v122, 2147483647
    %v335 = vand.u32 %v334, 65535
    %v336 = vshra.s32 %v334, 16
    %v337 = vcvt.s32.f32 %v335
    %v338 = vcvt.s32.f32 %v336
    %339 = vmin.xlane.f32.xlu0 %v338
    %v340 = vpop.xlane.xlu0 %339
    %vm341 = vcmp.eq.f32.partialorder %v338, %v340
    %v342 = vsel %vm341, %v337, inf
    %343 = vmin.xlane.f32.xlu0 %v342
    %v344 = vpop.xlane.xlu0 %343
    %v345 = vcvt.f32.s32 %v344
    %v346 = vcvt.f32.s32 %v340
    %v347 = vshll.u32 %v346, 16
    %v348 = vadd.s32 %v347, %v345
    %v349 = vsel %vm41, %v123, 2147483647
    %v350 = vand.u32 %v349, 65535
    %v351 = vshra.s32 %v349, 16
    %v352 = vcvt.s32.f32 %v350
    %v353 = vcvt.s32.f32 %v351
    %354 = vmin.xlane.f32.xlu0 %v353
    %v355 = vpop.xlane.xlu0 %354
    %vm356 = vcmp.eq.f32.partialorder %v353, %v355
    %v357 = vsel %vm356, %v352, inf
    %358 = vmin.xlane.f32.xlu0 %v357
    %v359 = vpop.xlane.xlu0 %358
    %v360 = vcvt.f32.s32 %v359
    %v361 = vcvt.f32.s32 %v355
    %v362 = vshll.u32 %v361, 16
    %v363 = vadd.s32 %v362, %v360
    %vm364 = vcmp.lt.s32.totalorder %v138, 31
    %v365 = vsel %vm364, %v138, 31
    %vm366 = vcmp.lt.s32.totalorder %v153, 31
    %v367 = vsel %vm366, %v153, 31
    %vm368 = vcmp.lt.s32.totalorder %v168, 31
    %v369 = vsel %vm368, %v168, 31
    %vm370 = vcmp.lt.s32.totalorder %v183, 31
    %v371 = vsel %vm370, %v183, 31
    %vm372 = vcmp.lt.s32.totalorder %v198, 31
    %v373 = vsel %vm372, %v198, 31
    %vm374 = vcmp.lt.s32.totalorder %v213, 31
    %v375 = vsel %vm374, %v213, 31
    %vm376 = vcmp.lt.s32.totalorder %v228, 31
    %v377 = vsel %vm376, %v228, 31
    %vm378 = vcmp.lt.s32.totalorder %v243, 31
    %v379 = vsel %vm378, %v243, 31
    %vm380 = vcmp.lt.s32.totalorder %v258, 31
    %v381 = vsel %vm380, %v258, 31
    %vm382 = vcmp.lt.s32.totalorder %v273, 31
    %v383 = vsel %vm382, %v273, 31
    %vm384 = vcmp.lt.s32.totalorder %v288, 31
    %v385 = vsel %vm384, %v288, 31
    %vm386 = vcmp.lt.s32.totalorder %v303, 31
    %v387 = vsel %vm386, %v303, 31
    %vm388 = vcmp.lt.s32.totalorder %v318, 31
    %v389 = vsel %vm388, %v318, 31
    %vm390 = vcmp.lt.s32.totalorder %v333, 31
    %v391 = vsel %vm390, %v333, 31
    %vm392 = vcmp.lt.s32.totalorder %v348, 31
    %v393 = vsel %vm392, %v348, 31
    %vm394 = vcmp.lt.s32.totalorder %v363, 31
    %v395 = vsel %vm394, %v363, 31
    %v396 = vperm.slane %v365, %v91
    %v397 = vadd.s32 %v91, 4294967288
    %v398 = vperm.slane %v367, %v397
    %vm399 = vcmask 130112
    %v400 = vsel %vm399, %v398, %v396
    %v401 = vadd.s32 %v91, 4294967280
    %v402 = vperm.slane %v369, %v401
    %vm403 = vcmask 195712
    %v404 = vsel %vm403, %v402, %v400
    %v405 = vadd.s32 %v91, 4294967272
    %v406 = vperm.slane %v371, %v405
    %vm407 = vcmask 261312
    %v408 = vsel %vm407, %v406, %v404
    %v409 = vadd.s32 %v91, 4294967264
    %v410 = vperm.slane %v373, %v409
    %vm411 = vcmask 326912
    %v412 = vsel %vm411, %v410, %v408
    %v413 = vadd.s32 %v91, 4294967256
    %v414 = vperm.slane %v375, %v413
    %vm415 = vcmask 392512
    %v416 = vsel %vm415, %v414, %v412
    %v417 = vadd.s32 %v91, 4294967248
    %v418 = vperm.slane %v377, %v417
    %vm419 = vcmask 458112
    %v420 = vsel %vm419, %v418, %v416
    %v421 = vadd.s32 %v91, 4294967240
    %v422 = vperm.slane %v379, %v421
    %vm423 = vcmask 523712
    %v424 = vsel %vm423, %v422, %v420
    %v425 = vadd.s32 %v91, 4294967232
    %v426 = vperm.slane %v381, %v425
    %vm427 = vcmask 589312
    %v428 = vsel %vm427, %v426, %v424
    %v429 = vadd.s32 %v91, 4294967224
    %v430 = vperm.slane %v383, %v429
    %vm431 = vcmask 654912
    %v432 = vsel %vm431, %v430, %v428
    %v433 = vadd.s32 %v91, 4294967216
    %v434 = vperm.slane %v385, %v433
    %vm435 = vcmask 720512
    %v436 = vsel %vm435, %v434, %v432
    %v437 = vadd.s32 %v91, 4294967208
    %v438 = vperm.slane %v387, %v437
    %vm439 = vcmask 786112
    %v440 = vsel %vm439, %v438, %v436
    %v441 = vadd.s32 %v91, 4294967200
    %v442 = vperm.slane %v389, %v441
    %vm443 = vcmask 851712
    %v444 = vsel %vm443, %v442, %v440
    %v445 = vadd.s32 %v91, 4294967192
    %v446 = vperm.slane %v391, %v445
    %vm447 = vcmask 917312
    %v448 = vsel %vm447, %v446, %v444
    %v449 = vadd.s32 %v91, 4294967184
    %v450 = vperm.slane %v393, %v449
    %vm451 = vcmask 982912
    %v452 = vsel %vm451, %v450, %v448
    %v453 = vadd.s32 %v91, 4294967176
    %v454 = vperm.slane %v395, %v453
    %vm455 = vcmask 1048512
    %v456 = vsel %vm455, %v454, %v452
    %457 = vst [vmem:[#allocation5] sm:$0x1] %v456
    // Predicated region
    $region10: #{tpu_custom_call.1} parent=1 // pred_check
      _
    $region11: #{tpu_custom_call.1} parent=1 // pred_check_branch
      %459 = sbr.rel (0) target = $region13
    $region12: #{tpu_custom_call.1} parent=1 // pred_region
      %461 = vsyncadd [#allocation4], 0
      %s463 = sshll.u32 [#allocation5], 4
      %s464 = int_to_ptr.vmem [resolvable:$true] %s463
      %s465 = sshll.u32 %s1, 4
      %s466 = int_to_ptr.hbm [resolvable:$true] %s465
      %468 = dma.vmem_to_hbm [thread:$0]  %s464, 16, %s466, [#allocation4]
    $region13: #{tpu_custom_call.1} parent=1 // pred_fallthru
      _
    // Predicated region
    $region14: #{tpu_custom_call.1} parent=1 // pred_check
      _
    $region15: #{tpu_custom_call.1} parent=1 // pred_check_branch
      %470 = sbr.rel (0) target = $region17
    $region16: #{tpu_custom_call.1} parent=1 // pred_region
      %472 = dma.done [#allocation4], 16
    $region17: #{tpu_custom_call.1} parent=1 // pred_fallthru
      _
    %473 = vsyncpa [#allocation3], 1
    %474 = vsyncpa [#allocation4], 1

</llo_original>
